<compile_context>
chip_gen: v7x
topology: tpu7x:2x2x1
jax: 0.10.0
libtpu: 0.0.40
codegen_flags: <defaults>
</compile_context>

<pallas_src>
import functools

import jax
import jax.numpy as jnp
import numpy as np
from jax.experimental import pallas as pl
from jax.experimental.pallas import tpu as pltpu

NEG_SLOPE = 0.01  # nn.LeakyReLU default
EPS = 1e-5        # nn.BatchNorm2d default


def _leaky(x):
    # exact for 0 < slope < 1; one VALU op instead of compare+select
    return jnp.maximum(x, NEG_SLOPE * x)


def _bottleneck_kernel(x_ref, w1_ref, b1_ref, w2_ref, b2_ref, o_ref, *, H, W):
    # x_ref  : (N, C_in, H*W)    f32   NCHW input, spatial flattened on lanes
    # w1_ref : (C_mid, C_in)     bf16  1x1 conv weight, BN1 scale folded in
    # b1_ref : (C_mid, 1)        f32   folded BN1 shift
    # w2_ref : (C_out, 9*C_mid)  bf16  3x3 conv weight, im2col tap-major, BN2 scale folded in
    # b2_ref : (C_out, 1)        f32   folded BN2 shift
    # o_ref  : (N, C_out, H*W)   f32
    HW = H * W
    N = x_ref.shape[0]

    # ---- hoisted spatial-validity masks on the flattened H*W lane axis
    lane = jax.lax.broadcasted_iota(jnp.int32, (1, HW), 1)
    col = lane % W
    row_ok = {-1: lane >= W, 0: None, 1: lane < HW - W}
    col_ok = {-1: col >= 1, 0: None, 1: col <= W - 2}

    w1 = w1_ref[...]
    w2 = w2_ref[...]
    b1 = b1_ref[...]
    b2 = b2_ref[...]

    # Static loop over the (tiny) batch: one kernel step total, per the
    # single-TC (v5e/v6e) feedback.  Matmul / VPU ops below are full-width on
    # the lane axis (HW = 256 lanes).
    for n in range(N):
        x = x_ref[n]                                            # (C_in, HW) f32

        # ---- conv1 (1x1): one MXU matmul (bf16 in, f32 acc) + folded-BN bias + LeakyReLU
        y1 = jnp.dot(w1, x.astype(jnp.bfloat16),
                     preferred_element_type=jnp.float32)        # (C_mid, HW)
        y1 = _leaky(y1 + b1)

        # ---- conv2 (3x3, pad=1): build the 9 shifted taps in registers.
        # A spatial shift (di, dj) of the flattened map is a circular lane roll
        # (XLU) by -(di*W + dj); positions whose true tap falls outside the
        # image are zeroed by the hoisted row/column masks (the roll wrap lands
        # exactly on masked positions).
        taps = []
        for ki in range(3):
            for kj in range(3):
                di, dj = ki - 1, kj - 1
                if di == 0 and dj == 0:
                    taps.append(y1)                             # centre tap == y1
                    continue
                shift = (-(di * W + dj)) % HW
                t = pltpu.roll(y1, shift=shift, axis=1)
                m_row, m_col = row_ok[di], col_ok[dj]
                if m_row is not None and m_col is not None:
                    m = jnp.logical_and(m_row, m_col)
                elif m_row is not None:
                    m = m_row
                else:
                    m = m_col
                taps.append(jnp.where(m, t, 0.0))
        col_mat = jnp.concatenate(taps, axis=0).astype(jnp.bfloat16)  # (9*C_mid, HW)

        # ONE MXU matmul with K = 9*C_mid, then folded-BN bias + LeakyReLU
        y2 = jnp.dot(w2, col_mat, preferred_element_type=jnp.float32)  # (C_out, HW)
        y2 = _leaky(y2 + b2)

        # ---- residual add in f32; lane-dense store (last dim = H*W)
        o_ref[n] = (x + y2).astype(o_ref.dtype)


def darknet_bottleneck(x_nchw, w1, s1, b1, w2, s2, b2):
    """x_nchw: (N, C, H, W) f32. w1: (C_mid, C_in). w2: HWIO (3,3,C_mid,C_out).
    s*/b*: folded BN scale/shift. Returns (N, C, H, W)."""
    N, C_in, H, W = x_nchw.shape
    C_mid = w1.shape[0]
    C_out = w2.shape[3]
    assert C_out == C_in
    HW = H * W

    # free (metadata) reshape: spatial onto the lane axis, no transpose, no pad
    x_flat = x_nchw.reshape(N, C_in, HW)

    # Fold BN scales into the conv weights in f32, then cast to bf16 for the MXU.
    w1_bf = (w1 * s1[:, None]).astype(jnp.bfloat16)                     # (C_mid, C_in)
    w2r = jnp.transpose(w2, (3, 0, 1, 2)).reshape(C_out, 9 * C_mid)     # tap-major im2col
    w2r_bf = (w2r * s2[:, None]).astype(jnp.bfloat16)                   # (C_out, 9*C_mid)
    b1_ = b1.reshape(C_mid, 1).astype(jnp.float32)
    b2_ = b2.reshape(C_out, 1).astype(jnp.float32)

    kernel = functools.partial(_bottleneck_kernel, H=H, W=W)

    out_flat = pl.pallas_call(
        kernel,
        out_shape=jax.ShapeDtypeStruct((N, C_out, HW), x_nchw.dtype),
        grid_spec=pltpu.PrefetchScalarGridSpec(
            num_scalar_prefetch=0,
            grid=(1,),
            in_specs=[
                pl.BlockSpec((N, C_in, HW), lambda i: (0, 0, 0)),
                pl.BlockSpec((C_mid, C_in), lambda i: (0, 0)),
                pl.BlockSpec((C_mid, 1), lambda i: (0, 0)),
                pl.BlockSpec((C_out, 9 * C_mid), lambda i: (0, 0)),
                pl.BlockSpec((C_out, 1), lambda i: (0, 0)),
            ],
            out_specs=pl.BlockSpec((N, C_out, HW), lambda i: (0, 0, 0)),
        ),
        compiler_params=pltpu.CompilerParams(
            dimension_semantics=("arbitrary",)),
    )(x_flat, w1_bf, b1_, w2r_bf, b2_)

    return out_flat.reshape(N, C_out, H, W)


def _reference(x_nchw, w1, s1, b1, w2, s2, b2):
    """Plain-JAX (f32, HIGHEST precision) reference of the same forward."""
    x = jnp.transpose(x_nchw, (0, 2, 3, 1))                 # NHWC
    C_mid, C_in = w1.shape
    y1 = jax.lax.conv_general_dilated(
        x, jnp.transpose(w1).reshape(1, 1, C_in, C_mid), (1, 1), 'VALID',
        dimension_numbers=('NHWC', 'HWIO', 'NHWC'),
        precision=jax.lax.Precision.HIGHEST)
    y1 = _leaky(y1 * s1 + b1)
    y2 = jax.lax.conv_general_dilated(
        y1, w2, (1, 1), ((1, 1), (1, 1)),
        dimension_numbers=('NHWC', 'HWIO', 'NHWC'),
        precision=jax.lax.Precision.HIGHEST)
    y2 = _leaky(y2 * s2 + b2)
    return jnp.transpose(x + y2, (0, 3, 1, 2))


def _init_params(key, ch_in):
    """Deterministic synthetic params (Conv2d weights + folded BN scale/shift)."""
    ch_mid = round(ch_in / 2)
    ks = jax.random.split(key, 8)
    # conv1: torch weight (C_mid, C_in, 1, 1) -> matmul form (C_mid, C_in)
    w1 = 0.1 * jax.random.normal(ks[0], (ch_mid, ch_in), jnp.float32)
    g1 = 1.0 + 0.1 * jax.random.normal(ks[1], (ch_mid,), jnp.float32)
    be1 = 0.1 * jax.random.normal(ks[2], (ch_mid,), jnp.float32)
    m1 = 0.1 * jax.random.normal(ks[3], (ch_mid,), jnp.float32)
    v1 = jnp.abs(jax.random.normal(ks[4], (ch_mid,), jnp.float32)) + 0.5
    s1 = g1 / jnp.sqrt(v1 + EPS)
    b1 = be1 - m1 * s1
    # conv2: torch weight (C_out, C_mid, 3, 3) -> HWIO (3, 3, C_mid, C_out)
    w2 = 0.1 * jax.random.normal(ks[5], (3, 3, ch_mid, ch_in), jnp.float32)
    g2 = 1.0 + 0.1 * jax.random.normal(ks[6], (ch_in,), jnp.float32)
    be2 = 0.1 * jax.random.normal(ks[7], (ch_in,), jnp.float32)
    m2 = jnp.zeros((ch_in,), jnp.float32)
    v2 = jnp.ones((ch_in,), jnp.float32)
    s2 = g2 / jnp.sqrt(v2 + EPS)
    b2 = be2 - m2 * s2
    return w1, s1, b1, w2, s2, b2


if __name__ == "__main__":
    key = jax.random.PRNGKey(0)
    k_x, k_p = jax.random.split(key)

    N, C, H, W = 2, 4, 16, 16
    x = jax.random.normal(k_x, (N, C, H, W), jnp.float32)
    params = _init_params(k_p, C)

    out = jax.jit(darknet_bottleneck)(x, *params)
    out = jax.block_until_ready(out)

    ref = _reference(x, *params)
    np.testing.assert_allclose(np.asarray(out), np.asarray(ref),
                               rtol=2e-2, atol=2e-2)

    print("KERNEL_OK")
</pallas_src>

<mosaic_0001>
module attributes {stable_mosaic.version = 11 : i64} {
  func.func @_bottleneck_kernel(%arg0: i32, %arg1: memref<2x4x256xf32, #tpu.memory_space<vmem>>, %arg2: memref<2x4xbf16, #tpu.memory_space<vmem>>, %arg3: memref<2x1xf32, #tpu.memory_space<vmem>>, %arg4: memref<4x18xbf16, #tpu.memory_space<vmem>>, %arg5: memref<4x1xf32, #tpu.memory_space<vmem>>, %arg6: memref<2x4x256xf32, #tpu.memory_space<vmem>>) attributes {dimension_semantics = [#tpu.dimension_semantics<arbitrary>], iteration_bounds = array<i64: 1>, scalar_prefetch = 0 : i64, scratch_operands = 0 : i64, tpu.core_type = #tpu.core_type<tc>, window_params = [{pipeline_mode = #tpu.pipeline_mode<synchronous>, transform_indices = @transform_0, window_bounds = array<i64: 2, 4, 256>}, {pipeline_mode = #tpu.pipeline_mode<synchronous>, transform_indices = @transform_1, window_bounds = array<i64: 2, 4>}, {pipeline_mode = #tpu.pipeline_mode<synchronous>, transform_indices = @transform_2, window_bounds = array<i64: 2, 1>}, {pipeline_mode = #tpu.pipeline_mode<synchronous>, transform_indices = @transform_3, window_bounds = array<i64: 4, 18>}, {pipeline_mode = #tpu.pipeline_mode<synchronous>, transform_indices = @transform_4, window_bounds = array<i64: 4, 1>}, {pipeline_mode = #tpu.pipeline_mode<synchronous>, transform_indices = @transform_5, window_bounds = array<i64: 2, 4, 256>}]} {
    %0 = tpu.iota {dimensions = array<i32: 1>} : vector<1x256xi32>
    %c16_i32 = arith.constant 16 : i32
    %c0_i32 = arith.constant 0 : i32
    %1 = arith.cmpi eq, %c16_i32, %c0_i32 : i32
    %c1_i32 = arith.constant 1 : i32
    %2 = arith.select %1, %c1_i32, %c16_i32 : i32
    %3 = vector.broadcast %2 : i32 to vector<1x256xi32>
    %4 = arith.remsi %0, %3 : vector<1x256xi32>
    %c0_i32_0 = arith.constant 0 : i32
    %5 = vector.broadcast %c0_i32_0 : i32 to vector<1x256xi32>
    %6 = arith.cmpi ne, %4, %5 : vector<1x256xi32>
    %c0_i32_1 = arith.constant 0 : i32
    %7 = vector.broadcast %c0_i32_1 : i32 to vector<1x256xi32>
    %8 = arith.cmpi slt, %4, %7 : vector<1x256xi32>
    %c0_i32_2 = arith.constant 0 : i32
    %9 = arith.cmpi slt, %2, %c0_i32_2 : i32
    %10 = vector.broadcast %9 : i1 to vector<1x256xi1>
    %11 = vector.broadcast %10 : vector<1x256xi1> to vector<1x256xi1>
    %12 = arith.xori %8, %11 : vector<1x256xi1>
    %13 = arith.andi %12, %6 : vector<1x256xi1>
    %14 = vector.broadcast %2 : i32 to vector<1x256xi32>
    %15 = arith.addi %4, %14 : vector<1x256xi32>
    %16 = arith.select %13, %15, %4 : vector<1x256xi1>, vector<1x256xi32>
    %c16_i32_3 = arith.constant 16 : i32
    %17 = vector.broadcast %c16_i32_3 : i32 to vector<1x256xi32>
    %18 = arith.cmpi sge, %0, %17 : vector<1x256xi32>
    %c240_i32 = arith.constant 240 : i32
    %19 = vector.broadcast %c240_i32 : i32 to vector<1x256xi32>
    %20 = arith.cmpi slt, %0, %19 : vector<1x256xi32>
    %c1_i32_4 = arith.constant 1 : i32
    %21 = vector.broadcast %c1_i32_4 : i32 to vector<1x256xi32>
    %22 = arith.cmpi sge, %16, %21 : vector<1x256xi32>
    %c14_i32 = arith.constant 14 : i32
    %23 = vector.broadcast %c14_i32 : i32 to vector<1x256xi32>
    %24 = arith.cmpi sle, %16, %23 : vector<1x256xi32>
    %c0 = arith.constant 0 : index
    %c0_5 = arith.constant 0 : index
    %25 = vector.load %arg2[%c0, %c0_5] : memref<2x4xbf16, #tpu.memory_space<vmem>>, vector<2x4xbf16>
    %c0_6 = arith.constant 0 : index
    %c0_7 = arith.constant 0 : index
    %26 = vector.load %arg4[%c0_6, %c0_7] : memref<4x18xbf16, #tpu.memory_space<vmem>>, vector<4x18xbf16>
    %c0_8 = arith.constant 0 : index
    %c0_9 = arith.constant 0 : index
    %27 = vector.load %arg3[%c0_8, %c0_9] : memref<2x1xf32, #tpu.memory_space<vmem>>, vector<2x1xf32>
    %c0_10 = arith.constant 0 : index
    %c0_11 = arith.constant 0 : index
    %28 = vector.load %arg5[%c0_10, %c0_11] : memref<4x1xf32, #tpu.memory_space<vmem>>, vector<4x1xf32>
    %c0_12 = arith.constant 0 : index
    %c0_13 = arith.constant 0 : index
    %c0_14 = arith.constant 0 : index
    %29 = vector.load %arg1[%c0_12, %c0_13, %c0_14] : memref<2x4x256xf32, #tpu.memory_space<vmem>>, vector<1x4x256xf32>
    %30 = vector.shape_cast %29 : vector<1x4x256xf32> to vector<4x256xf32>
    %31 = arith.truncf %30 : vector<4x256xf32> to vector<4x256xbf16>
    %cst = arith.constant dense<0.000000e+00> : vector<2x256xf32>
    %32 = tpu.matmul %25, %31, %cst {dimension_numbers = #tpu.dot_dimension_numbers<[1], [0], [0], [1], [0, 0, 1, 1], [], []>} : vector<2x4xbf16>, vector<4x256xbf16>, vector<2x256xf32> -> vector<2x256xf32>
    %33 = vector.broadcast %27 : vector<2x1xf32> to vector<2x256xf32>
    %34 = arith.addf %32, %33 : vector<2x256xf32>
    %cst_15 = arith.constant 0.00999999977 : f32
    %35 = vector.broadcast %cst_15 : f32 to vector<2x256xf32>
    %36 = arith.mulf %35, %34 : vector<2x256xf32>
    %37 = arith.maximumf %34, %36 : vector<2x256xf32>
    %c17_i32 = arith.constant 17 : i32
    %38 = tpu.dynamic_rotate %37 by %c17_i32 dim 1 : vector<2x256xf32>, i32 -> vector<2x256xf32>
    %39 = arith.andi %18, %22 : vector<1x256xi1>
    %cst_16 = arith.constant 0.000000e+00 : f32
    %40 = vector.shape_cast %39 : vector<1x256xi1> to vector<1x256xi1>
    %41 = vector.broadcast %40 : vector<1x256xi1> to vector<2x256xi1>
    %42 = vector.broadcast %cst_16 : f32 to vector<2x256xf32>
    %43 = arith.select %41, %38, %42 : vector<2x256xi1>, vector<2x256xf32>
    %c16_i32_17 = arith.constant 16 : i32
    %44 = tpu.dynamic_rotate %37 by %c16_i32_17 dim 1 : vector<2x256xf32>, i32 -> vector<2x256xf32>
    %cst_18 = arith.constant 0.000000e+00 : f32
    %45 = vector.shape_cast %18 : vector<1x256xi1> to vector<1x256xi1>
    %46 = vector.broadcast %45 : vector<1x256xi1> to vector<2x256xi1>
    %47 = vector.broadcast %cst_18 : f32 to vector<2x256xf32>
    %48 = arith.select %46, %44, %47 : vector<2x256xi1>, vector<2x256xf32>
    %c15_i32 = arith.constant 15 : i32
    %49 = tpu.dynamic_rotate %37 by %c15_i32 dim 1 : vector<2x256xf32>, i32 -> vector<2x256xf32>
    %50 = arith.andi %18, %24 : vector<1x256xi1>
    %cst_19 = arith.constant 0.000000e+00 : f32
    %51 = vector.shape_cast %50 : vector<1x256xi1> to vector<1x256xi1>
    %52 = vector.broadcast %51 : vector<1x256xi1> to vector<2x256xi1>
    %53 = vector.broadcast %cst_19 : f32 to vector<2x256xf32>
    %54 = arith.select %52, %49, %53 : vector<2x256xi1>, vector<2x256xf32>
    %c1_i32_20 = arith.constant 1 : i32
    %55 = tpu.dynamic_rotate %37 by %c1_i32_20 dim 1 : vector<2x256xf32>, i32 -> vector<2x256xf32>
    %cst_21 = arith.constant 0.000000e+00 : f32
    %56 = vector.shape_cast %22 : vector<1x256xi1> to vector<1x256xi1>
    %57 = vector.broadcast %56 : vector<1x256xi1> to vector<2x256xi1>
    %58 = vector.broadcast %cst_21 : f32 to vector<2x256xf32>
    %59 = arith.select %57, %55, %58 : vector<2x256xi1>, vector<2x256xf32>
    %c255_i32 = arith.constant 255 : i32
    %60 = tpu.dynamic_rotate %37 by %c255_i32 dim 1 : vector<2x256xf32>, i32 -> vector<2x256xf32>
    %cst_22 = arith.constant 0.000000e+00 : f32
    %61 = vector.shape_cast %24 : vector<1x256xi1> to vector<1x256xi1>
    %62 = vector.broadcast %61 : vector<1x256xi1> to vector<2x256xi1>
    %63 = vector.broadcast %cst_22 : f32 to vector<2x256xf32>
    %64 = arith.select %62, %60, %63 : vector<2x256xi1>, vector<2x256xf32>
    %c241_i32 = arith.constant 241 : i32
    %65 = tpu.dynamic_rotate %37 by %c241_i32 dim 1 : vector<2x256xf32>, i32 -> vector<2x256xf32>
    %66 = arith.andi %20, %22 : vector<1x256xi1>
    %cst_23 = arith.constant 0.000000e+00 : f32
    %67 = vector.shape_cast %66 : vector<1x256xi1> to vector<1x256xi1>
    %68 = vector.broadcast %67 : vector<1x256xi1> to vector<2x256xi1>
    %69 = vector.broadcast %cst_23 : f32 to vector<2x256xf32>
    %70 = arith.select %68, %65, %69 : vector<2x256xi1>, vector<2x256xf32>
    %c240_i32_24 = arith.constant 240 : i32
    %71 = tpu.dynamic_rotate %37 by %c240_i32_24 dim 1 : vector<2x256xf32>, i32 -> vector<2x256xf32>
    %cst_25 = arith.constant 0.000000e+00 : f32
    %72 = vector.shape_cast %20 : vector<1x256xi1> to vector<1x256xi1>
    %73 = vector.broadcast %72 : vector<1x256xi1> to vector<2x256xi1>
    %74 = vector.broadcast %cst_25 : f32 to vector<2x256xf32>
    %75 = arith.select %73, %71, %74 : vector<2x256xi1>, vector<2x256xf32>
    %c239_i32 = arith.constant 239 : i32
    %76 = tpu.dynamic_rotate %37 by %c239_i32 dim 1 : vector<2x256xf32>, i32 -> vector<2x256xf32>
    %77 = arith.andi %20, %24 : vector<1x256xi1>
    %cst_26 = arith.constant 0.000000e+00 : f32
    %78 = vector.shape_cast %77 : vector<1x256xi1> to vector<1x256xi1>
    %79 = vector.broadcast %78 : vector<1x256xi1> to vector<2x256xi1>
    %80 = vector.broadcast %cst_26 : f32 to vector<2x256xf32>
    %81 = arith.select %79, %76, %80 : vector<2x256xi1>, vector<2x256xf32>
    %82 = tpu.concatenate %43, %48, %54, %59, %37, %64, %70, %75, %81 in 0 : vector<2x256xf32>, vector<2x256xf32>, vector<2x256xf32>, vector<2x256xf32>, vector<2x256xf32>, vector<2x256xf32>, vector<2x256xf32>, vector<2x256xf32>, vector<2x256xf32> -> vector<18x256xf32>
    %83 = arith.truncf %82 : vector<18x256xf32> to vector<18x256xbf16>
    %cst_27 = arith.constant dense<0.000000e+00> : vector<4x256xf32>
    %84 = tpu.matmul %26, %83, %cst_27 {dimension_numbers = #tpu.dot_dimension_numbers<[1], [0], [0], [1], [0, 0, 1, 1], [], []>} : vector<4x18xbf16>, vector<18x256xbf16>, vector<4x256xf32> -> vector<4x256xf32>
    %85 = vector.broadcast %28 : vector<4x1xf32> to vector<4x256xf32>
    %86 = arith.addf %84, %85 : vector<4x256xf32>
    %cst_28 = arith.constant 0.00999999977 : f32
    %87 = vector.broadcast %cst_28 : f32 to vector<4x256xf32>
    %88 = arith.mulf %87, %86 : vector<4x256xf32>
    %89 = arith.maximumf %86, %88 : vector<4x256xf32>
    %90 = arith.addf %30, %89 : vector<4x256xf32>
    %c0_29 = arith.constant 0 : index
    %c0_30 = arith.constant 0 : index
    %c0_31 = arith.constant 0 : index
    %91 = vector.load %arg6[%c0_29, %c0_30, %c0_31] : memref<2x4x256xf32, #tpu.memory_space<vmem>>, vector<1x4x256xf32>
    %92 = vector.shape_cast %91 : vector<1x4x256xf32> to vector<4x256xf32>
    %93 = vector.shape_cast %90 : vector<4x256xf32> to vector<1x4x256xf32>
    tpu.vector_store %arg6[%c0_29, %c0_30, %c0_31], %93 {strides = array<i32>} : memref<2x4x256xf32, #tpu.memory_space<vmem>>, vector<1x4x256xf32>,
    %c1 = arith.constant 1 : index
    %c0_32 = arith.constant 0 : index
    %c0_33 = arith.constant 0 : index
    %94 = vector.load %arg1[%c1, %c0_32, %c0_33] : memref<2x4x256xf32, #tpu.memory_space<vmem>>, vector<1x4x256xf32>
    %95 = vector.shape_cast %94 : vector<1x4x256xf32> to vector<4x256xf32>
    %96 = arith.truncf %95 : vector<4x256xf32> to vector<4x256xbf16>
    %cst_34 = arith.constant dense<0.000000e+00> : vector<2x256xf32>
    %97 = tpu.matmul %25, %96, %cst_34 {dimension_numbers = #tpu.dot_dimension_numbers<[1], [0], [0], [1], [0, 0, 1, 1], [], []>} : vector<2x4xbf16>, vector<4x256xbf16>, vector<2x256xf32> -> vector<2x256xf32>
    %98 = vector.broadcast %27 : vector<2x1xf32> to vector<2x256xf32>
    %99 = arith.addf %97, %98 : vector<2x256xf32>
    %cst_35 = arith.constant 0.00999999977 : f32
    %100 = vector.broadcast %cst_35 : f32 to vector<2x256xf32>
    %101 = arith.mulf %100, %99 : vector<2x256xf32>
    %102 = arith.maximumf %99, %101 : vector<2x256xf32>
    %c17_i32_36 = arith.constant 17 : i32
    %103 = tpu.dynamic_rotate %102 by %c17_i32_36 dim 1 : vector<2x256xf32>, i32 -> vector<2x256xf32>
    %104 = arith.andi %18, %22 : vector<1x256xi1>
    %cst_37 = arith.constant 0.000000e+00 : f32
    %105 = vector.shape_cast %104 : vector<1x256xi1> to vector<1x256xi1>
    %106 = vector.broadcast %105 : vector<1x256xi1> to vector<2x256xi1>
    %107 = vector.broadcast %cst_37 : f32 to vector<2x256xf32>
    %108 = arith.select %106, %103, %107 : vector<2x256xi1>, vector<2x256xf32>
    %c16_i32_38 = arith.constant 16 : i32
    %109 = tpu.dynamic_rotate %102 by %c16_i32_38 dim 1 : vector<2x256xf32>, i32 -> vector<2x256xf32>
    %cst_39 = arith.constant 0.000000e+00 : f32
    %110 = vector.shape_cast %18 : vector<1x256xi1> to vector<1x256xi1>
    %111 = vector.broadcast %110 : vector<1x256xi1> to vector<2x256xi1>
    %112 = vector.broadcast %cst_39 : f32 to vector<2x256xf32>
    %113 = arith.select %111, %109, %112 : vector<2x256xi1>, vector<2x256xf32>
    %c15_i32_40 = arith.constant 15 : i32
    %114 = tpu.dynamic_rotate %102 by %c15_i32_40 dim 1 : vector<2x256xf32>, i32 -> vector<2x256xf32>
    %115 = arith.andi %18, %24 : vector<1x256xi1>
    %cst_41 = arith.constant 0.000000e+00 : f32
    %116 = vector.shape_cast %115 : vector<1x256xi1> to vector<1x256xi1>
    %117 = vector.broadcast %116 : vector<1x256xi1> to vector<2x256xi1>
    %118 = vector.broadcast %cst_41 : f32 to vector<2x256xf32>
    %119 = arith.select %117, %114, %118 : vector<2x256xi1>, vector<2x256xf32>
    %c1_i32_42 = arith.constant 1 : i32
    %120 = tpu.dynamic_rotate %102 by %c1_i32_42 dim 1 : vector<2x256xf32>, i32 -> vector<2x256xf32>
    %cst_43 = arith.constant 0.000000e+00 : f32
    %121 = vector.shape_cast %22 : vector<1x256xi1> to vector<1x256xi1>
    %122 = vector.broadcast %121 : vector<1x256xi1> to vector<2x256xi1>
    %123 = vector.broadcast %cst_43 : f32 to vector<2x256xf32>
    %124 = arith.select %122, %120, %123 : vector<2x256xi1>, vector<2x256xf32>
    %c255_i32_44 = arith.constant 255 : i32
    %125 = tpu.dynamic_rotate %102 by %c255_i32_44 dim 1 : vector<2x256xf32>, i32 -> vector<2x256xf32>
    %cst_45 = arith.constant 0.000000e+00 : f32
    %126 = vector.shape_cast %24 : vector<1x256xi1> to vector<1x256xi1>
    %127 = vector.broadcast %126 : vector<1x256xi1> to vector<2x256xi1>
    %128 = vector.broadcast %cst_45 : f32 to vector<2x256xf32>
    %129 = arith.select %127, %125, %128 : vector<2x256xi1>, vector<2x256xf32>
    %c241_i32_46 = arith.constant 241 : i32
    %130 = tpu.dynamic_rotate %102 by %c241_i32_46 dim 1 : vector<2x256xf32>, i32 -> vector<2x256xf32>
    %131 = arith.andi %20, %22 : vector<1x256xi1>
    %cst_47 = arith.constant 0.000000e+00 : f32
    %132 = vector.shape_cast %131 : vector<1x256xi1> to vector<1x256xi1>
    %133 = vector.broadcast %132 : vector<1x256xi1> to vector<2x256xi1>
    %134 = vector.broadcast %cst_47 : f32 to vector<2x256xf32>
    %135 = arith.select %133, %130, %134 : vector<2x256xi1>, vector<2x256xf32>
    %c240_i32_48 = arith.constant 240 : i32
    %136 = tpu.dynamic_rotate %102 by %c240_i32_48 dim 1 : vector<2x256xf32>, i32 -> vector<2x256xf32>
    %cst_49 = arith.constant 0.000000e+00 : f32
    %137 = vector.shape_cast %20 : vector<1x256xi1> to vector<1x256xi1>
    %138 = vector.broadcast %137 : vector<1x256xi1> to vector<2x256xi1>
    %139 = vector.broadcast %cst_49 : f32 to vector<2x256xf32>
    %140 = arith.select %138, %136, %139 : vector<2x256xi1>, vector<2x256xf32>
    %c239_i32_50 = arith.constant 239 : i32
    %141 = tpu.dynamic_rotate %102 by %c239_i32_50 dim 1 : vector<2x256xf32>, i32 -> vector<2x256xf32>
    %142 = arith.andi %20, %24 : vector<1x256xi1>
    %cst_51 = arith.constant 0.000000e+00 : f32
    %143 = vector.shape_cast %142 : vector<1x256xi1> to vector<1x256xi1>
    %144 = vector.broadcast %143 : vector<1x256xi1> to vector<2x256xi1>
    %145 = vector.broadcast %cst_51 : f32 to vector<2x256xf32>
    %146 = arith.select %144, %141, %145 : vector<2x256xi1>, vector<2x256xf32>
    %147 = tpu.concatenate %108, %113, %119, %124, %102, %129, %135, %140, %146 in 0 : vector<2x256xf32>, vector<2x256xf32>, vector<2x256xf32>, vector<2x256xf32>, vector<2x256xf32>, vector<2x256xf32>, vector<2x256xf32>, vector<2x256xf32>, vector<2x256xf32> -> vector<18x256xf32>
    %148 = arith.truncf %147 : vector<18x256xf32> to vector<18x256xbf16>
    %cst_52 = arith.constant dense<0.000000e+00> : vector<4x256xf32>
    %149 = tpu.matmul %26, %148, %cst_52 {dimension_numbers = #tpu.dot_dimension_numbers<[1], [0], [0], [1], [0, 0, 1, 1], [], []>} : vector<4x18xbf16>, vector<18x256xbf16>, vector<4x256xf32> -> vector<4x256xf32>
    %150 = vector.broadcast %28 : vector<4x1xf32> to vector<4x256xf32>
    %151 = arith.addf %149, %150 : vector<4x256xf32>
    %cst_53 = arith.constant 0.00999999977 : f32
    %152 = vector.broadcast %cst_53 : f32 to vector<4x256xf32>
    %153 = arith.mulf %152, %151 : vector<4x256xf32>
    %154 = arith.maximumf %151, %153 : vector<4x256xf32>
    %155 = arith.addf %95, %154 : vector<4x256xf32>
    %c1_54 = arith.constant 1 : index
    %c0_55 = arith.constant 0 : index
    %c0_56 = arith.constant 0 : index
    %156 = vector.load %arg6[%c1_54, %c0_55, %c0_56] : memref<2x4x256xf32, #tpu.memory_space<vmem>>, vector<1x4x256xf32>
    %157 = vector.shape_cast %156 : vector<1x4x256xf32> to vector<4x256xf32>
    %158 = vector.shape_cast %155 : vector<4x256xf32> to vector<1x4x256xf32>
    tpu.vector_store %arg6[%c1_54, %c0_55, %c0_56], %158 {strides = array<i32>} : memref<2x4x256xf32, #tpu.memory_space<vmem>>, vector<1x4x256xf32>,
    return
  }
  func.func @transform_0(%arg0: i32) -> (i32, i32, i32) {
    %c0_i32 = arith.constant 0 : i32
    %c0_i32_0 = arith.constant 0 : i32
    %c0_i32_1 = arith.constant 0 : i32
    %c0_i32_2 = arith.constant 0 : i32
    return %c0_i32, %c0_i32_0, %c0_i32_1 : i32, i32, i32
  }
  func.func @transform_1(%arg0: i32) -> (i32, i32) {
    %c0_i32 = arith.constant 0 : i32
    %c0_i32_0 = arith.constant 0 : i32
    %c0_i32_1 = arith.constant 0 : i32
    return %c0_i32, %c0_i32_0 : i32, i32
  }
  func.func @transform_2(%arg0: i32) -> (i32, i32) {
    %c0_i32 = arith.constant 0 : i32
    %c0_i32_0 = arith.constant 0 : i32
    %c0_i32_1 = arith.constant 0 : i32
    return %c0_i32, %c0_i32_0 : i32, i32
  }
  func.func @transform_3(%arg0: i32) -> (i32, i32) {
    %c0_i32 = arith.constant 0 : i32
    %c0_i32_0 = arith.constant 0 : i32
    %c0_i32_1 = arith.constant 0 : i32
    return %c0_i32, %c0_i32_0 : i32, i32
  }
  func.func @transform_4(%arg0: i32) -> (i32, i32) {
    %c0_i32 = arith.constant 0 : i32
    %c0_i32_0 = arith.constant 0 : i32
    %c0_i32_1 = arith.constant 0 : i32
    return %c0_i32, %c0_i32_0 : i32, i32
  }
  func.func @transform_5(%arg0: i32) -> (i32, i32, i32) {
    %c0_i32 = arith.constant 0 : i32
    %c0_i32_0 = arith.constant 0 : i32
    %c0_i32_1 = arith.constant 0 : i32
    %c0_i32_2 = arith.constant 0 : i32
    return %c0_i32, %c0_i32_0, %c0_i32_1 : i32, i32, i32
  }
}

</mosaic_0001>

<llo_original>
// kernel: darknet_bottleneck.1
$region0: #{darknet_bottleneck.1}
  #allocation0 [shape = 'u32[]', space=smem, size = 0x4, offset = 0x4, fixed_abs, tag = 'smem constant byte address 0x4 - core index']
  #allocation1 [shape = 'u32[144,128]{1,0:T(1,128)}', space=vmem, size = 0x12000, scoped, tag = 'internal scratch']
  %s0 = inlined_call_operand.vmem [shape: f32[2,4,256], index: 0, kind: input, shape index: {}]
  %s1 = inlined_call_operand.vmem [shape: bf16[2,4], index: 1, kind: input, shape index: {}]
  %s2 = inlined_call_operand.vmem [shape: f32[2,1], index: 2, kind: input, shape index: {}]
  %s3 = inlined_call_operand.vmem [shape: bf16[4,18], index: 3, kind: input, shape index: {}]
  %s4 = inlined_call_operand.vmem [shape: f32[4,1], index: 4, kind: input, shape index: {}]
  %s5 = inlined_call_operand.vmem [shape: f32[2,4,256], index: 5, kind: output, shape index: {}]
  %s6 = sld [smem:[#allocation0]]
  $region30: #{darknet_bottleneck.1} parent=0
    _
  %s8 = ssub.s32 1, %s6
  %s9 = scalar_select 0, %s8, %s6
  // Predicated region
  $region2: #{darknet_bottleneck.1} parent=0 // pred_check
    _
  $region3: #{darknet_bottleneck.1} parent=0 // pred_check_branch
    %11 = sbr.rel (0) target = $region5
  $region4: #{darknet_bottleneck.1} parent=0 // pred_region
    _
  $region5: #{darknet_bottleneck.1} parent=0 // pred_fallthru
    _
  // Predicated region
  $region6: #{darknet_bottleneck.1} parent=0 // pred_check
    _
  $region7: #{darknet_bottleneck.1} parent=0 // pred_check_branch
    %13 = sbr.rel (0) target = $region9
  $region8: #{darknet_bottleneck.1} parent=0 // pred_region
    _
  $region9: #{darknet_bottleneck.1} parent=0 // pred_fallthru
    _
  // Predicated region
  $region10: #{darknet_bottleneck.1} parent=0 // pred_check
    _
  $region11: #{darknet_bottleneck.1} parent=0 // pred_check_branch
    %15 = sbr.rel (0) target = $region13
  $region12: #{darknet_bottleneck.1} parent=0 // pred_region
    _
  $region13: #{darknet_bottleneck.1} parent=0 // pred_fallthru
    _
  // Predicated region
  $region14: #{darknet_bottleneck.1} parent=0 // pred_check
    _
  $region15: #{darknet_bottleneck.1} parent=0 // pred_check_branch
    %17 = sbr.rel (0) target = $region17
  $region16: #{darknet_bottleneck.1} parent=0 // pred_region
    _
  $region17: #{darknet_bottleneck.1} parent=0 // pred_fallthru
    _
  // Predicated region
  $region18: #{darknet_bottleneck.1} parent=0 // pred_check
    _
  $region19: #{darknet_bottleneck.1} parent=0 // pred_check_branch
    %19 = sbr.rel (0) target = $region21
  $region20: #{darknet_bottleneck.1} parent=0 // pred_region
    _
  $region21: #{darknet_bottleneck.1} parent=0 // pred_fallthru
    _
  %v21 = vlaneseq
  %v22 = vand.u32 %v21, 127
  %v23 = vadd.s32 %v22, 128
  %vm24 = vcmp.lt.s32.totalorder %v22, 0
  %v25 = vsub.s32 0, %v22
  %v26 = vsel %vm24, %v25, %v22
  %v27 = vshrl.u32 %v26, 4
  %v28 = vand.u32 %v26, 15
  %v29 = vsub.s32 0, %v28
  %v30 = vsel %vm24, %v29, %v28
  %vm31 = vcmp.lt.s32.totalorder %v23, 0
  %v32 = vsub.s32 0, %v23
  %v33 = vsel %vm31, %v32, %v23
  %v34 = vshrl.u32 %v33, 4
  %v35 = vand.u32 %v33, 15
  %v36 = vsub.s32 0, %v35
  %v37 = vsel %vm31, %v36, %v35
  %vm38 = vcmp.ne.s32.totalorder %v30, 0
  %vm39 = vcmp.ne.s32.totalorder %v37, 0
  %vm40 = vcmp.lt.s32.totalorder %v30, 0
  %vm41 = vcmp.lt.s32.totalorder %v37, 0
  %vm42 = vmand %vm40, %vm38
  %vm43 = vmand %vm41, %vm39
  %v44 = vadd.s32 %v30, 16
  %v45 = vadd.s32 %v37, 16
  %v46 = vsel %vm42, %v44, %v30
  %v47 = vsel %vm43, %v45, %v37
  %vm48 = vcmp.ge.s32.totalorder %v22, 16
  %vm49 = vcmp.ge.s32.totalorder %v23, 16
  %vm50 = vcmp.lt.s32.totalorder %v22, 240
  %vm51 = vcmp.lt.s32.totalorder %v23, 240
  %vm52 = vcmp.ge.s32.totalorder %v46, 1
  %vm53 = vcmp.ge.s32.totalorder %v47, 1
  %vm54 = vcmp.le.s32.totalorder %v46, 14
  %vm55 = vcmp.le.s32.totalorder %v47, 14
  %v56 = vld [vmem:[%s1] sm:$0x1]
  %v57 = vld [vmem:[%s3] sm:$0x3]
  %v58 = vld [vmem:[%s2] sm:$0x3]
  %v59 = vld [vmem:[%s4] sm:$0xf]
  %v60 = vld [vmem:[%s0] sm:$0xff]
  %v62 = vcombine.high %v60, %v60
  %v64 = vpack.c.bf16 %v60, %v60
  %v65 = vpack.c.bf16 %v62, %v62
  %67 = vset.pattern.permute.xlu0 0
  %68 = vperm.xlu0 %67, %v58
  %v69 = vpop.permute.xlu0 %68
  %vm71 = vcmask 31744
  %v73 = vsel %vm71, %v56, 0
  %vm75 = vcmask 1041408
  %v77 = vsel %vm75, %v64, 0
  %v80 = vsel %vm75, %v65, 0
  %82 = vmatprep.subr.bf16.mxu0 %v80
  %83 = vmatpush1.bf16.msra.mxu0 %v77
  %84 = vmatprep.subr.bf16.mxu0 0
  %85 = vmatpush1.bf16.msra.mxu0 0
  %86 = vmatprep.subr.bf16.mxu0 0
  %87 = vmatpush1.bf16.msra.mxu0 0
  %88 = vmatprep.subr.bf16.mxu0 0
  %89 = vmatpush1.bf16.msra.mxu0 0
  %90 = vmatprep.subr.bf16.mxu0 0
  %91 = vmatpush1.bf16.msra.mxu0 0
  %92 = vmatprep.subr.bf16.mxu0 0
  %93 = vmatpush1.bf16.msra.mxu0 0
  %94 = vmatprep.subr.bf16.mxu0 0
  %95 = vmatpush1.bf16.msra.mxu0 0
  %96 = vmatprep.subr.bf16.mxu0 0
  %97 = vmatpush1.bf16.msra.mxu0 0
  %98 = vmatprep.subr.bf16.mxu0 0
  %99 = vmatpush1.bf16.msra.mxu0 0
  %100 = vmatprep.subr.bf16.mxu0 0
  %101 = vmatpush1.bf16.msra.mxu0 0
  %102 = vmatprep.subr.bf16.mxu0 0
  %103 = vmatpush1.bf16.msra.mxu0 0
  %104 = vmatprep.subr.bf16.mxu0 0
  %105 = vmatpush1.bf16.msra.mxu0 0
  %106 = vmatprep.subr.bf16.mxu0 0
  %107 = vmatpush1.bf16.msra.mxu0 0
  %108 = vmatprep.subr.bf16.mxu0 0
  %109 = vmatpush1.bf16.msra.mxu0 0
  %110 = vmatprep.subr.bf16.mxu0 0
  %111 = vmatpush1.bf16.msra.mxu0 0
  %112 = vmatprep.subr.bf16.mxu0 0
  %113 = vmatpush1.bf16.msra.mxu0 0
  %114 = vmatprep.mubr.bf16.mxu0 0
  %115 = vmatmul.mubr.bf16.gmra.mrb[0].mxu0 %v73
  %v116 = vpop.f32.mrb[0].mxu0
  %v117 = vadd.f32 %v69, %v116
  %v118 = vpop.f32.mrb[0].mxu0
  %v119 = vadd.f32 %v69, %v118
  %v120 = vpop.f32.mrb[0].mxu0
  %v121 = vpop.f32.mrb[0].mxu0
  %122 = vdwg.mxu0
  %v123 = vmul.f32 %v117, 0.01
  %v124 = vmul.f32 %v119, 0.01
  %v125 = vmax.f32 %v117, %v123
  %v126 = vmax.f32 %v119, %v124
  %127 = vrot.lane.b32.xlu0 %v125, 17
  %v128 = vpop.permute.xlu0 %127
  %129 = vrot.lane.b32.xlu0 %v126, 17
  %v130 = vpop.permute.xlu0 %129
  %vm131 = vcmp.lt.s32.totalorder %v22, 17
  %v132 = vsel %vm131, %v128, %v130
  %v133 = vsel %vm131, %v130, %v128
  %vm134 = vmand %vm48, %vm52
  %vm135 = vmand %vm49, %vm53
  %v136 = vsel %vm134, 1, 0
  %v137 = vsel %vm135, 1, 0
  %vm138 = vcmp.eq.s32.totalorder %v136, 1
  %vm139 = vcmp.eq.s32.totalorder %v137, 1
  %v140 = vsel %vm138, %v133, 0.0
  %v141 = vsel %vm139, %v132, 0.0
  %142 = vrot.lane.b32.xlu0 %v125, 16
  %v143 = vpop.permute.xlu0 %142
  %144 = vrot.lane.b32.xlu0 %v126, 16
  %v145 = vpop.permute.xlu0 %144
  %vm146 = vcmp.lt.s32.totalorder %v22, 16
  %v147 = vsel %vm146, %v143, %v145
  %v148 = vsel %vm146, %v145, %v143
  %v149 = vsel %vm48, 1, 0
  %v150 = vsel %vm49, 1, 0
  %vm151 = vcmp.eq.s32.totalorder %v149, 1
  %vm152 = vcmp.eq.s32.totalorder %v150, 1
  %v153 = vsel %vm151, %v148, 0.0
  %v154 = vsel %vm152, %v147, 0.0
  %155 = vrot.lane.b32.xlu0 %v125, 15
  %v156 = vpop.permute.xlu0 %155
  %157 = vrot.lane.b32.xlu0 %v126, 15
  %v158 = vpop.permute.xlu0 %157
  %vm159 = vcmp.lt.s32.totalorder %v22, 15
  %v160 = vsel %vm159, %v156, %v158
  %v161 = vsel %vm159, %v158, %v156
  %vm162 = vmand %vm48, %vm54
  %vm163 = vmand %vm49, %vm55
  %v164 = vsel %vm162, 1, 0
  %v165 = vsel %vm163, 1, 0
  %vm166 = vcmp.eq.s32.totalorder %v164, 1
  %vm167 = vcmp.eq.s32.totalorder %v165, 1
  %v168 = vsel %vm166, %v161, 0.0
  %v169 = vsel %vm167, %v160, 0.0
  %170 = vrot.lane.b32.xlu0 %v125, 1
  %v171 = vpop.permute.xlu0 %170
  %172 = vrot.lane.b32.xlu0 %v126, 1
  %v173 = vpop.permute.xlu0 %172
  %vm174 = vcmp.lt.s32.totalorder %v22, 1
  %v175 = vsel %vm174, %v171, %v173
  %v176 = vsel %vm174, %v173, %v171
  %v177 = vsel %vm52, 1, 0
  %v178 = vsel %vm53, 1, 0
  %vm179 = vcmp.eq.s32.totalorder %v177, 1
  %vm180 = vcmp.eq.s32.totalorder %v178, 1
  %v181 = vsel %vm179, %v176, 0.0
  %v182 = vsel %vm180, %v175, 0.0
  %183 = vrot.lane.b32.xlu0 %v125, 127
  %v184 = vpop.permute.xlu0 %183
  %185 = vrot.lane.b32.xlu0 %v126, 127
  %v186 = vpop.permute.xlu0 %185
  %vm187 = vcmp.lt.s32.totalorder %v22, 127
  %v188 = vsel %vm187, %v184, %v186
  %v189 = vsel %vm187, %v186, %v184
  %v190 = vsel %vm54, 1, 0
  %v191 = vsel %vm55, 1, 0
  %vm192 = vcmp.eq.s32.totalorder %v190, 1
  %vm193 = vcmp.eq.s32.totalorder %v191, 1
  %v194 = vsel %vm192, %v188, 0.0
  %v195 = vsel %vm193, %v189, 0.0
  %196 = vrot.lane.b32.xlu0 %v125, 113
  %v197 = vpop.permute.xlu0 %196
  %198 = vrot.lane.b32.xlu0 %v126, 113
  %v199 = vpop.permute.xlu0 %198
  %vm200 = vcmp.lt.s32.totalorder %v22, 113
  %v201 = vsel %vm200, %v197, %v199
  %v202 = vsel %vm200, %v199, %v197
  %vm203 = vmand %vm50, %vm52
  %vm204 = vmand %vm51, %vm53
  %v205 = vsel %vm203, 1, 0
  %v206 = vsel %vm204, 1, 0
  %vm207 = vcmp.eq.s32.totalorder %v205, 1
  %vm208 = vcmp.eq.s32.totalorder %v206, 1
  %v209 = vsel %vm207, %v201, 0.0
  %v210 = vsel %vm208, %v202, 0.0
  %211 = vrot.lane.b32.xlu0 %v125, 112
  %v212 = vpop.permute.xlu0 %211
  %213 = vrot.lane.b32.xlu0 %v126, 112
  %v214 = vpop.permute.xlu0 %213
  %vm215 = vcmp.lt.s32.totalorder %v22, 112
  %v216 = vsel %vm215, %v212, %v214
  %v217 = vsel %vm215, %v214, %v212
  %v218 = vsel %vm50, 1, 0
  %v219 = vsel %vm51, 1, 0
  %vm220 = vcmp.eq.s32.totalorder %v218, 1
  %vm221 = vcmp.eq.s32.totalorder %v219, 1
  %v222 = vsel %vm220, %v216, 0.0
  %v223 = vsel %vm221, %v217, 0.0
  %224 = vrot.lane.b32.xlu0 %v125, 111
  %v225 = vpop.permute.xlu0 %224
  %226 = vrot.lane.b32.xlu0 %v126, 111
  %v227 = vpop.permute.xlu0 %226
  %vm228 = vcmp.lt.s32.totalorder %v22, 111
  %v229 = vsel %vm228, %v225, %v227
  %v230 = vsel %vm228, %v227, %v225
  %vm231 = vmand %vm50, %vm54
  %vm232 = vmand %vm51, %vm55
  %v233 = vsel %vm231, 1, 0
  %v234 = vsel %vm232, 1, 0
  %vm235 = vcmp.eq.s32.totalorder %v233, 1
  %vm236 = vcmp.eq.s32.totalorder %v234, 1
  %v237 = vsel %vm235, %v229, 0.0
  %v238 = vsel %vm236, %v230, 0.0
  %v241 = vrot.slane %v153, 6
  %v242 = vrot.slane %v154, 6
  %v247 = vrot.slane %v168, 4
  %v248 = vrot.slane %v169, 4
  %v253 = vrot.slane %v181, 2
  %v254 = vrot.slane %v182, 2
  %v259 = vrot.slane %v194, 6
  %v260 = vrot.slane %v195, 6
  %v265 = vrot.slane %v209, 4
  %v266 = vrot.slane %v210, 4
  %v271 = vrot.slane %v222, 2
  %v272 = vrot.slane %v223, 2
  %v275 = vsel %vm75, %v140, %v241
  %v276 = vsel %vm75, %v141, %v242
  %vm277 = vcmask 1043456
  %v278 = vsel %vm277, %v275, %v247
  %v279 = vsel %vm277, %v276, %v248
  %vm280 = vcmask 1045504
  %v281 = vsel %vm280, %v278, %v253
  %v282 = vsel %vm280, %v279, %v254
  %v283 = vsel %vm75, %v125, %v259
  %v284 = vsel %vm75, %v126, %v260
  %v285 = vsel %vm277, %v283, %v265
  %v286 = vsel %vm277, %v284, %v266
  %v287 = vsel %vm280, %v285, %v271
  %v288 = vsel %vm280, %v286, %v272
  %v289 = vpack.c.bf16 %v287, %v281
  %v290 = vpack.c.bf16 %v288, %v282
  %v291 = vpack.c.bf16 %v237, %v237
  %v292 = vpack.c.bf16 %v238, %v238
  %294 = vset.pattern.permute.xlu0 0
  %295 = vperm.xlu0 %294, %v59
  %v296 = vpop.permute.xlu0 %295
  %vm298 = vcmask 146432
  %v300 = vsel %vm298, %v57, 0
  %vm302 = vcmask 1040384
  %v304 = vsel %vm302, %v291, 0
  %v307 = vsel %vm302, %v292, 0
  %309 = vmatprep.subr.bf16.mxu0 %v290
  %310 = vmatpush1.bf16.msra.mxu0 %v289
  %311 = vmatprep.subr.bf16.mxu0 %v307
  %312 = vmatpush1.bf16.msra.mxu0 %v304
  %313 = vmatprep.subr.bf16.mxu0 0
  %314 = vmatpush1.bf16.msra.mxu0 0
  %315 = vmatprep.subr.bf16.mxu0 0
  %316 = vmatpush1.bf16.msra.mxu0 0
  %317 = vmatprep.subr.bf16.mxu0 0
  %318 = vmatpush1.bf16.msra.mxu0 0
  %319 = vmatprep.subr.bf16.mxu0 0
  %320 = vmatpush1.bf16.msra.mxu0 0
  %321 = vmatprep.subr.bf16.mxu0 0
  %322 = vmatpush1.bf16.msra.mxu0 0
  %323 = vmatprep.subr.bf16.mxu0 0
  %324 = vmatpush1.bf16.msra.mxu0 0
  %325 = vmatprep.subr.bf16.mxu0 0
  %326 = vmatpush1.bf16.msra.mxu0 0
  %327 = vmatprep.subr.bf16.mxu0 0
  %328 = vmatpush1.bf16.msra.mxu0 0
  %329 = vmatprep.subr.bf16.mxu0 0
  %330 = vmatpush1.bf16.msra.mxu0 0
  %331 = vmatprep.subr.bf16.mxu0 0
  %332 = vmatpush1.bf16.msra.mxu0 0
  %333 = vmatprep.subr.bf16.mxu0 0
  %334 = vmatpush1.bf16.msra.mxu0 0
  %335 = vmatprep.subr.bf16.mxu0 0
  %336 = vmatpush1.bf16.msra.mxu0 0
  %337 = vmatprep.subr.bf16.mxu0 0
  %338 = vmatpush1.bf16.msra.mxu0 0
  %339 = vmatprep.subr.bf16.mxu0 0
  %340 = vmatpush1.bf16.msra.mxu0 0
  %341 = vmatprep.mubr.bf16.mxu0 0
  %342 = vmatmul.mubr.bf16.gmra.mrb[0].mxu0 %v300
  %v343 = vpop.f32.mrb[0].mxu0
  %v344 = vadd.f32 %v296, %v343
  %v345 = vpop.f32.mrb[0].mxu0
  %v346 = vadd.f32 %v296, %v345
  %v347 = vpop.f32.mrb[0].mxu0
  %v348 = vpop.f32.mrb[0].mxu0
  %349 = vdwg.mxu0
  %v350 = vmul.f32 %v344, 0.01
  %v351 = vmul.f32 %v346, 0.01
  %v352 = vmax.f32 %v344, %v350
  %v353 = vmax.f32 %v346, %v351
  %v356 = vcombine.low %v352, %v353
  %v358 = vadd.f32 %v60, %v356
  %359 = vst [vmem:[%s5] sm:$0xff] %v358
  %s360 = scalar_lea.vmem %s0, 8
  %v361 = vld [vmem:[%s360] sm:$0xff]
  %v363 = vcombine.high %v361, %v361
  %v365 = vpack.c.bf16 %v361, %v361
  %v366 = vpack.c.bf16 %v363, %v363
  %v368 = vsel %vm75, %v365, 0
  %v371 = vsel %vm75, %v366, 0
  %373 = vmatprep.subr.bf16.mxu0 %v371
  %374 = vmatpush1.bf16.msra.mxu0 %v368
  %375 = vmatprep.subr.bf16.mxu0 0
  %376 = vmatpush1.bf16.msra.mxu0 0
  %377 = vmatprep.subr.bf16.mxu0 0
  %378 = vmatpush1.bf16.msra.mxu0 0
  %379 = vmatprep.subr.bf16.mxu0 0
  %380 = vmatpush1.bf16.msra.mxu0 0
  %381 = vmatprep.subr.bf16.mxu0 0
  %382 = vmatpush1.bf16.msra.mxu0 0
  %383 = vmatprep.subr.bf16.mxu0 0
  %384 = vmatpush1.bf16.msra.mxu0 0
  %385 = vmatprep.subr.bf16.mxu0 0
  %386 = vmatpush1.bf16.msra.mxu0 0
  %387 = vmatprep.subr.bf16.mxu0 0
  %388 = vmatpush1.bf16.msra.mxu0 0
  %389 = vmatprep.subr.bf16.mxu0 0
  %390 = vmatpush1.bf16.msra.mxu0 0
  %391 = vmatprep.subr.bf16.mxu0 0
  %392 = vmatpush1.bf16.msra.mxu0 0
  %393 = vmatprep.subr.bf16.mxu0 0
  %394 = vmatpush1.bf16.msra.mxu0 0
  %395 = vmatprep.subr.bf16.mxu0 0
  %396 = vmatpush1.bf16.msra.mxu0 0
  %397 = vmatprep.subr.bf16.mxu0 0
  %398 = vmatpush1.bf16.msra.mxu0 0
  %399 = vmatprep.subr.bf16.mxu0 0
  %400 = vmatpush1.bf16.msra.mxu0 0
  %401 = vmatprep.subr.bf16.mxu0 0
  %402 = vmatpush1.bf16.msra.mxu0 0
  %403 = vmatprep.subr.bf16.mxu0 0
  %404 = vmatpush1.bf16.msra.mxu0 0
  %405 = vmatprep.mubr.bf16.mxu0 0
  %406 = vmatmul.mubr.bf16.gmra.mrb[0].mxu0 %v73
  %v407 = vpop.f32.mrb[0].mxu0
  %v408 = vadd.f32 %v69, %v407
  %v409 = vpop.f32.mrb[0].mxu0
  %v410 = vadd.f32 %v69, %v409
  %v411 = vpop.f32.mrb[0].mxu0
  %v412 = vpop.f32.mrb[0].mxu0
  %413 = vdwg.mxu0
  %v414 = vmul.f32 %v408, 0.01
  %v415 = vmul.f32 %v410, 0.01
  %v416 = vmax.f32 %v408, %v414
  %v417 = vmax.f32 %v410, %v415
  %418 = vrot.lane.b32.xlu0 %v416, 17
  %v419 = vpop.permute.xlu0 %418
  %420 = vrot.lane.b32.xlu0 %v417, 17
  %v421 = vpop.permute.xlu0 %420
  %v422 = vsel %vm131, %v419, %v421
  %v423 = vsel %vm131, %v421, %v419
  %v424 = vsel %vm138, %v423, 0.0
  %v425 = vsel %vm139, %v422, 0.0
  %426 = vrot.lane.b32.xlu0 %v416, 16
  %v427 = vpop.permute.xlu0 %426
  %428 = vrot.lane.b32.xlu0 %v417, 16
  %v429 = vpop.permute.xlu0 %428
  %v430 = vsel %vm146, %v427, %v429
  %v431 = vsel %vm146, %v429, %v427
  %v432 = vsel %vm151, %v431, 0.0
  %v433 = vsel %vm152, %v430, 0.0
  %434 = vrot.lane.b32.xlu0 %v416, 15
  %v435 = vpop.permute.xlu0 %434
  %436 = vrot.lane.b32.xlu0 %v417, 15
  %v437 = vpop.permute.xlu0 %436
  %v438 = vsel %vm159, %v435, %v437
  %v439 = vsel %vm159, %v437, %v435
  %v440 = vsel %vm166, %v439, 0.0
  %v441 = vsel %vm167, %v438, 0.0
  %442 = vrot.lane.b32.xlu0 %v416, 1
  %v443 = vpop.permute.xlu0 %442
  %444 = vrot.lane.b32.xlu0 %v417, 1
  %v445 = vpop.permute.xlu0 %444
  %v446 = vsel %vm174, %v443, %v445
  %v447 = vsel %vm174, %v445, %v443
  %v448 = vsel %vm179, %v447, 0.0
  %v449 = vsel %vm180, %v446, 0.0
  %450 = vrot.lane.b32.xlu0 %v416, 127
  %v451 = vpop.permute.xlu0 %450
  %452 = vrot.lane.b32.xlu0 %v417, 127
  %v453 = vpop.permute.xlu0 %452
  %v454 = vsel %vm187, %v451, %v453
  %v455 = vsel %vm187, %v453, %v451
  %v456 = vsel %vm192, %v454, 0.0
  %v457 = vsel %vm193, %v455, 0.0
  %458 = vrot.lane.b32.xlu0 %v416, 113
  %v459 = vpop.permute.xlu0 %458
  %460 = vrot.lane.b32.xlu0 %v417, 113
  %v461 = vpop.permute.xlu0 %460
  %v462 = vsel %vm200, %v459, %v461
  %v463 = vsel %vm200, %v461, %v459
  %v464 = vsel %vm207, %v462, 0.0
  %v465 = vsel %vm208, %v463, 0.0
  %466 = vrot.lane.b32.xlu0 %v416, 112
  %v467 = vpop.permute.xlu0 %466
  %468 = vrot.lane.b32.xlu0 %v417, 112
  %v469 = vpop.permute.xlu0 %468
  %v470 = vsel %vm215, %v467, %v469
  %v471 = vsel %vm215, %v469, %v467
  %v472 = vsel %vm220, %v470, 0.0
  %v473 = vsel %vm221, %v471, 0.0
  %474 = vrot.lane.b32.xlu0 %v416, 111
  %v475 = vpop.permute.xlu0 %474
  %476 = vrot.lane.b32.xlu0 %v417, 111
  %v477 = vpop.permute.xlu0 %476
  %v478 = vsel %vm228, %v475, %v477
  %v479 = vsel %vm228, %v477, %v475
  %v480 = vsel %vm235, %v478, 0.0
  %v481 = vsel %vm236, %v479, 0.0
  %v484 = vrot.slane %v432, 6
  %v485 = vrot.slane %v433, 6
  %v490 = vrot.slane %v440, 4
  %v491 = vrot.slane %v441, 4
  %v496 = vrot.slane %v448, 2
  %v497 = vrot.slane %v449, 2
  %v502 = vrot.slane %v456, 6
  %v503 = vrot.slane %v457, 6
  %v508 = vrot.slane %v464, 4
  %v509 = vrot.slane %v465, 4
  %v514 = vrot.slane %v472, 2
  %v515 = vrot.slane %v473, 2
  %v518 = vsel %vm75, %v424, %v484
  %v519 = vsel %vm75, %v425, %v485
  %v520 = vsel %vm277, %v518, %v490
  %v521 = vsel %vm277, %v519, %v491
  %v522 = vsel %vm280, %v520, %v496
  %v523 = vsel %vm280, %v521, %v497
  %v524 = vsel %vm75, %v416, %v502
  %v525 = vsel %vm75, %v417, %v503
  %v526 = vsel %vm277, %v524, %v508
  %v527 = vsel %vm277, %v525, %v509
  %v528 = vsel %vm280, %v526, %v514
  %v529 = vsel %vm280, %v527, %v515
  %v530 = vpack.c.bf16 %v528, %v522
  %v531 = vpack.c.bf16 %v529, %v523
  %v532 = vpack.c.bf16 %v480, %v480
  %v533 = vpack.c.bf16 %v481, %v481
  %v535 = vsel %vm302, %v532, 0
  %v538 = vsel %vm302, %v533, 0
  %540 = vmatprep.subr.bf16.mxu0 %v531
  %541 = vmatpush1.bf16.msra.mxu0 %v530
  %542 = vmatprep.subr.bf16.mxu0 %v538
  %543 = vmatpush1.bf16.msra.mxu0 %v535
  %544 = vmatprep.subr.bf16.mxu0 0
  %545 = vmatpush1.bf16.msra.mxu0 0
  %546 = vmatprep.subr.bf16.mxu0 0
  %547 = vmatpush1.bf16.msra.mxu0 0
  %548 = vmatprep.subr.bf16.mxu0 0
  %549 = vmatpush1.bf16.msra.mxu0 0
  %550 = vmatprep.subr.bf16.mxu0 0
  %551 = vmatpush1.bf16.msra.mxu0 0
  %552 = vmatprep.subr.bf16.mxu0 0
  %553 = vmatpush1.bf16.msra.mxu0 0
  %554 = vmatprep.subr.bf16.mxu0 0
  %555 = vmatpush1.bf16.msra.mxu0 0
  %556 = vmatprep.subr.bf16.mxu0 0
  %557 = vmatpush1.bf16.msra.mxu0 0
  %558 = vmatprep.subr.bf16.mxu0 0
  %559 = vmatpush1.bf16.msra.mxu0 0
  %560 = vmatprep.subr.bf16.mxu0 0
  %561 = vmatpush1.bf16.msra.mxu0 0
  %562 = vmatprep.subr.bf16.mxu0 0
  %563 = vmatpush1.bf16.msra.mxu0 0
  %564 = vmatprep.subr.bf16.mxu0 0
  %565 = vmatpush1.bf16.msra.mxu0 0
  %566 = vmatprep.subr.bf16.mxu0 0
  %567 = vmatpush1.bf16.msra.mxu0 0
  %568 = vmatprep.subr.bf16.mxu0 0
  %569 = vmatpush1.bf16.msra.mxu0 0
  %570 = vmatprep.subr.bf16.mxu0 0
  %571 = vmatpush1.bf16.msra.mxu0 0
  %572 = vmatprep.mubr.bf16.mxu0 0
  %573 = vmatmul.mubr.bf16.gmra.mrb[0].mxu0 %v300
  %v574 = vpop.f32.mrb[0].mxu0
  %v575 = vadd.f32 %v296, %v574
  %v576 = vpop.f32.mrb[0].mxu0
  %v577 = vadd.f32 %v296, %v576
  %v578 = vpop.f32.mrb[0].mxu0
  %v579 = vpop.f32.mrb[0].mxu0
  %580 = vdwg.mxu0
  %v581 = vmul.f32 %v575, 0.01
  %v582 = vmul.f32 %v577, 0.01
  %v583 = vmax.f32 %v575, %v581
  %v584 = vmax.f32 %v577, %v582
  %v587 = vcombine.low %v583, %v584
  %v589 = vadd.f32 %v361, %v587
  %s590 = scalar_lea.vmem %s5, 8
  %591 = vst [vmem:[%s590] sm:$0xff] %v589
  // Predicated region
  $region22: #{darknet_bottleneck.1} parent=0 // pred_check
    _
  $region23: #{darknet_bottleneck.1} parent=0 // pred_check_branch
    %593 = sbr.rel (0) target = $region25
  $region24: #{darknet_bottleneck.1} parent=0 // pred_region
    _
  $region25: #{darknet_bottleneck.1} parent=0 // pred_fallthru
    _
  // Predicated region
  $region26: #{darknet_bottleneck.1} parent=0 // pred_check
    _
  $region27: #{darknet_bottleneck.1} parent=0 // pred_check_branch
    %595 = sbr.rel (0) target = $region29
  $region28: #{darknet_bottleneck.1} parent=0 // pred_region
    _
  $region29: #{darknet_bottleneck.1} parent=0 // pred_fallthru
    _

</llo_original>
